<compile_context>
chip_gen: v7x
topology: tpu7x:2x2x1
jax: 0.10.0
libtpu: 0.0.40
codegen_flags: <defaults>
</compile_context>

<pallas_src>
import math

import jax
import jax.numpy as jnp
from jax import lax
from jax.experimental import pallas as pl
from jax.experimental.pallas import tpu as pltpu


def tokenizer_kernel(xnum_ref, xcat_ref, pnum_ref, pcat_ref, const_ref, out_ref):
    """One batch tile: whole (TB, n_tok*D) value built in registers, one store.

    xnum_ref  : (TB, d_num)         f32  VMEM tile (batch-tiled)
    xcat_ref  : (TB, C)             i32  VMEM tile (category offsets pre-folded)
    pnum_ref  : (d_num, n_tok*D)    f32  resident; pnum[k, (k+1)*D+d] = weight[k+1, d]
    pcat_ref  : (sum_cat, n_tok*D)  f32  resident; pcat[r, (T1+cat(r))*D+d] = emb[r, d]
    const_ref : (1, n_tok*D)        f32  resident; [weight[0]; bias] flattened
    out_ref   : (TB, n_tok*D)       f32  lane-dense output slab
    """
    TB = xnum_ref.shape[0]
    C = xcat_ref.shape[1]
    sum_cat = pcat_ref.shape[0]

    # Numerical tokens (incl. the implicit [CLS]/ones column handled by const):
    # single MXU matmul places weight[t, d] * x[:, t-1] into token t's lanes.
    num = jnp.dot(xnum_ref[...], pnum_ref[...],
                  preferred_element_type=jnp.float32)            # (TB, n_tok*D)

    # Categorical tokens: multi-hot over the offset-folded vocabulary (one 1
    # per category per row; category index ranges are disjoint), then one MXU
    # matmul gathers all TB rows for all categories at once.
    iota_v = lax.broadcasted_iota(jnp.int32, (TB, sum_cat), 1)
    mh = jnp.zeros((TB, sum_cat), jnp.float32)
    for c in range(C):                                           # static unroll
        mh = mh + (iota_v == xcat_ref[:, c:c + 1]).astype(jnp.float32)
    cat = jnp.dot(mh, pcat_ref[...],
                  preferred_element_type=jnp.float32)            # (TB, n_tok*D)

    # Single wide, unmasked, lane-dense store.  (Cast here to bf16 if the
    # downstream consumer allows it — halves HBM writeback, biggest win on v5e.)
    out_ref[...] = num + cat + const_ref[...]


def tokenizer_forward(x_num, x_cat, weight, emb, bias, category_offsets, *,
                      batch_tile=512):
    """Batch-tiled, pipelined Pallas call; lane-dense flat output layout."""
    B, d_num = x_num.shape
    T1, D = weight.shape
    assert T1 == d_num + 1
    C = x_cat.shape[1]
    sum_cat = emb.shape[0]
    n_tok = T1 + C
    flat_w = n_tok * D

    # Batch tile: multiple of 8, <= batch_tile, and chosen so the grid has >= 2
    # steps whenever B >= 16 (lets the "parallel" axis feed both v7x TCs).
    half = pl.cdiv(B, 2)
    TB = int(min(batch_tile, max(8, ((half + 7) // 8) * 8)))
    grid_b = pl.cdiv(B, TB)          # ragged tail handled by masked writeback

    x_num_p = x_num.astype(jnp.float32)
    # Fold the category offsets into the indices (tiny (B, C) int add) so the
    # kernel only sees flat vocabulary ids; no whole-batch SMEM prefetch.
    x_cat_p = x_cat.astype(jnp.int32) + category_offsets.astype(jnp.int32)[None, :]

    # ---- parameter-sized layout plumbing (O(params), no batch-sized ops) ----
    w = weight.astype(jnp.float32)
    e = emb.astype(jnp.float32)
    b_ = bias.astype(jnp.float32)

    # Numerical placement: pnum[k, (k+1)*D + d] = weight[k+1, d], zeros elsewhere.
    p_num = jnp.zeros((d_num, n_tok, D), jnp.float32)
    p_num = p_num.at[jnp.arange(d_num), jnp.arange(1, T1), :].set(w[1:])
    p_num = p_num.reshape(d_num, flat_w)

    # Categorical placement: pcat[r, (T1 + cat(r))*D + d] = emb[r, d].
    offs = category_offsets.astype(jnp.int32)
    row_cat = jnp.searchsorted(offs, jnp.arange(sum_cat, dtype=jnp.int32),
                               side="right") - 1
    p_cat = jnp.zeros((sum_cat, n_tok, D), jnp.float32)
    p_cat = p_cat.at[jnp.arange(sum_cat), T1 + row_cat, :].set(e)
    p_cat = p_cat.reshape(sum_cat, flat_w)

    # Constant row: weight[0] for the [CLS]/ones token, bias for every other.
    const_flat = jnp.concatenate([w[0:1], b_], axis=0).reshape(1, flat_w)

    cost = pl.CostEstimate(
        flops=2 * B * (d_num + sum_cat) * flat_w,
        transcendentals=0,
        bytes_accessed=(B * flat_w * 4                          # output
                        + B * (d_num + C) * 4                   # x_num + x_cat
                        + (d_num + sum_cat + 1) * flat_w * 4))  # resident params

    out_flat = pl.pallas_call(
        tokenizer_kernel,
        out_shape=jax.ShapeDtypeStruct((B, flat_w), jnp.float32),
        grid=(grid_b,),
        in_specs=[
            pl.BlockSpec((TB, d_num), lambda i: (i, 0)),        # x_num tile
            pl.BlockSpec((TB, C), lambda i: (i, 0)),            # x_cat tile
            pl.BlockSpec((d_num, flat_w), lambda i: (0, 0)),    # p_num  (resident)
            pl.BlockSpec((sum_cat, flat_w), lambda i: (0, 0)),  # p_cat  (resident)
            pl.BlockSpec((1, flat_w), lambda i: (0, 0)),        # consts (resident)
        ],
        out_specs=pl.BlockSpec((TB, flat_w), lambda i: (i, 0)),
        compiler_params=pltpu.CompilerParams(
            dimension_semantics=("parallel",),    # megacore-shard batch on v7x
            vmem_limit_bytes=32 * 1024 * 1024,
        ),
        cost_estimate=cost,
    )(x_num_p, x_cat_p, p_num, p_cat, const_flat)

    return out_flat.reshape(B, n_tok, D)


def tokenizer_reference(x_num, x_cat, weight, emb, bias, category_offsets):
    """Pure-JAX reference mirroring the PyTorch forward."""
    B = x_num.shape[0]
    d_token = weight.shape[1]
    x_num_ext = jnp.concatenate([jnp.ones((B, 1), jnp.float32), x_num], axis=1)
    x = weight[None] * x_num_ext[:, :, None]
    cat = emb[x_cat + category_offsets[None]]
    x = jnp.concatenate([x, cat], axis=1)
    bias_full = jnp.concatenate([jnp.zeros((1, d_token), jnp.float32), bias], axis=0)
    return x + bias_full[None]


def kaiming_uniform(key, shape, fan_in):
    # nn.init.kaiming_uniform_(w, a=sqrt(5)) => bound = 1/sqrt(fan_in)
    bound = 1.0 / math.sqrt(fan_in)
    return jax.random.uniform(key, shape, jnp.float32, -bound, bound)


if __name__ == "__main__":
    # Module hyper-parameters (small, consistent with the forward pass).
    d_numerical = 4
    categories = [3, 5, 7]
    d_token = 32
    B = 8

    n_cat = len(categories)
    sum_cat = sum(categories)
    T1 = d_numerical + 1                      # numerical tokens incl. ones column
    d_bias = d_numerical + n_cat

    key = jax.random.PRNGKey(0)
    k_w, k_b, k_e, k_xn, k_xc = jax.random.split(key, 5)

    # Deterministic parameter init (kaiming-uniform-like).
    weight = kaiming_uniform(k_w, (T1, d_token), d_token)             # (d_num+1, d_token)
    bias = kaiming_uniform(k_b, (d_bias, d_token), d_token)           # (d_bias,  d_token)
    emb = kaiming_uniform(k_e, (sum_cat, d_token), d_token)           # (sum(categories), d_token)
    category_offsets = jnp.cumsum(
        jnp.array([0] + categories[:-1], dtype=jnp.int32))            # (n_cat,)

    # Example inputs.
    x_num = jax.random.normal(k_xn, (B, d_numerical), jnp.float32)
    x_cat = jnp.stack(
        [jax.random.randint(jax.random.fold_in(k_xc, j), (B,), 0, categories[j])
         for j in range(n_cat)], axis=1).astype(jnp.int32)            # (B, n_cat)

    out = tokenizer_forward(x_num, x_cat, weight, emb, bias, category_offsets)
    out = jax.block_until_ready(out)

    ref = tokenizer_reference(x_num, x_cat, weight, emb, bias, category_offsets)
    assert out.shape == (B, T1 + n_cat, d_token), out.shape
    assert jnp.allclose(out, ref, atol=1e-5, rtol=1e-5), "mismatch vs reference"

    print("KERNEL_OK")
</pallas_src>

<mosaic_0001>
module attributes {stable_mosaic.version = 11 : i64} {
  func.func @tokenizer_kernel(%arg0: i32, %arg1: memref<8x4xf32, #tpu.memory_space<vmem>>, %arg2: memref<8x3xi32, #tpu.memory_space<vmem>>, %arg3: memref<4x256xf32, #tpu.memory_space<vmem>>, %arg4: memref<15x256xf32, #tpu.memory_space<vmem>>, %arg5: memref<1x256xf32, #tpu.memory_space<vmem>>, %arg6: memref<8x256xf32, #tpu.memory_space<vmem>>) attributes {dimension_semantics = [#tpu.dimension_semantics<parallel>], iteration_bounds = array<i64: 1>, scalar_prefetch = 0 : i64, scratch_operands = 0 : i64, tpu.core_type = #tpu.core_type<tc>, window_params = [{transform_indices = @transform_0, window_bounds = array<i64: 8, 4>}, {transform_indices = @transform_1, window_bounds = array<i64: 8, 3>}, {pipeline_mode = #tpu.pipeline_mode<synchronous>, transform_indices = @transform_2, window_bounds = array<i64: 4, 256>}, {pipeline_mode = #tpu.pipeline_mode<synchronous>, transform_indices = @transform_3, window_bounds = array<i64: 15, 256>}, {pipeline_mode = #tpu.pipeline_mode<synchronous>, transform_indices = @transform_4, window_bounds = array<i64: 1, 256>}, {transform_indices = @transform_5, window_bounds = array<i64: 8, 256>}]} {
    %c0 = arith.constant 0 : index
    %c0_0 = arith.constant 0 : index
    %0 = vector.load %arg1[%c0, %c0_0] : memref<8x4xf32, #tpu.memory_space<vmem>>, vector<8x4xf32>
    %c0_1 = arith.constant 0 : index
    %c0_2 = arith.constant 0 : index
    %1 = vector.load %arg3[%c0_1, %c0_2] : memref<4x256xf32, #tpu.memory_space<vmem>>, vector<4x256xf32>
    %cst = arith.constant dense<0.000000e+00> : vector<8x256xf32>
    %2 = tpu.matmul %0, %1, %cst {dimension_numbers = #tpu.dot_dimension_numbers<[1], [0], [0], [1], [0, 0, 1, 1], [], []>} : vector<8x4xf32>, vector<4x256xf32>, vector<8x256xf32> -> vector<8x256xf32>
    %3 = tpu.iota {dimensions = array<i32: 1>} : vector<8x15xi32>
    %cst_3 = arith.constant 0.000000e+00 : f32
    %4 = vector.broadcast %cst_3 : f32 to vector<8x15xf32>
    %c0_4 = arith.constant 0 : index
    %c0_5 = arith.constant 0 : index
    %5 = vector.load %arg2[%c0_4, %c0_5] : memref<8x3xi32, #tpu.memory_space<vmem>>, vector<8x1xi32>
    %6 = vector.broadcast %5 : vector<8x1xi32> to vector<8x15xi32>
    %7 = arith.cmpi eq, %3, %6 : vector<8x15xi32>
    %8 = arith.extui %7 : vector<8x15xi1> to vector<8x15xi32>
    %9 = arith.sitofp %8 : vector<8x15xi32> to vector<8x15xf32>
    %10 = arith.addf %4, %9 : vector<8x15xf32>
    %c0_6 = arith.constant 0 : index
    %c1 = arith.constant 1 : index
    %11 = vector.load %arg2[%c0_6, %c1] : memref<8x3xi32, #tpu.memory_space<vmem>>, vector<8x1xi32>
    %12 = vector.broadcast %11 : vector<8x1xi32> to vector<8x15xi32>
    %13 = arith.cmpi eq, %3, %12 : vector<8x15xi32>
    %14 = arith.extui %13 : vector<8x15xi1> to vector<8x15xi32>
    %15 = arith.sitofp %14 : vector<8x15xi32> to vector<8x15xf32>
    %16 = arith.addf %10, %15 : vector<8x15xf32>
    %c0_7 = arith.constant 0 : index
    %c2 = arith.constant 2 : index
    %17 = vector.load %arg2[%c0_7, %c2] : memref<8x3xi32, #tpu.memory_space<vmem>>, vector<8x1xi32>
    %18 = vector.broadcast %17 : vector<8x1xi32> to vector<8x15xi32>
    %19 = arith.cmpi eq, %3, %18 : vector<8x15xi32>
    %20 = arith.extui %19 : vector<8x15xi1> to vector<8x15xi32>
    %21 = arith.sitofp %20 : vector<8x15xi32> to vector<8x15xf32>
    %22 = arith.addf %16, %21 : vector<8x15xf32>
    %c0_8 = arith.constant 0 : index
    %c0_9 = arith.constant 0 : index
    %23 = vector.load %arg4[%c0_8, %c0_9] : memref<15x256xf32, #tpu.memory_space<vmem>>, vector<15x256xf32>
    %cst_10 = arith.constant dense<0.000000e+00> : vector<8x256xf32>
    %24 = tpu.matmul %22, %23, %cst_10 {dimension_numbers = #tpu.dot_dimension_numbers<[1], [0], [0], [1], [0, 0, 1, 1], [], []>} : vector<8x15xf32>, vector<15x256xf32>, vector<8x256xf32> -> vector<8x256xf32>
    %25 = arith.addf %2, %24 : vector<8x256xf32>
    %c0_11 = arith.constant 0 : index
    %c0_12 = arith.constant 0 : index
    %26 = vector.load %arg5[%c0_11, %c0_12] : memref<1x256xf32, #tpu.memory_space<vmem>>, vector<1x256xf32>
    %27 = vector.broadcast %26 : vector<1x256xf32> to vector<8x256xf32>
    %28 = arith.addf %25, %27 : vector<8x256xf32>
    %c0_13 = arith.constant 0 : index
    %c0_14 = arith.constant 0 : index
    %29 = vector.load %arg6[%c0_13, %c0_14] : memref<8x256xf32, #tpu.memory_space<vmem>>, vector<8x256xf32>
    tpu.vector_store %arg6[%c0_13, %c0_14], %28 {strides = array<i32>} : memref<8x256xf32, #tpu.memory_space<vmem>>, vector<8x256xf32>,
    return
  }
  func.func @transform_0(%arg0: i32) -> (i32, i32) {
    %c0_i32 = arith.constant 0 : i32
    %c0_i32_0 = arith.constant 0 : i32
    return %arg0, %c0_i32 : i32, i32
  }
  func.func @transform_1(%arg0: i32) -> (i32, i32) {
    %c0_i32 = arith.constant 0 : i32
    %c0_i32_0 = arith.constant 0 : i32
    return %arg0, %c0_i32 : i32, i32
  }
  func.func @transform_2(%arg0: i32) -> (i32, i32) {
    %c0_i32 = arith.constant 0 : i32
    %c0_i32_0 = arith.constant 0 : i32
    %c0_i32_1 = arith.constant 0 : i32
    return %c0_i32, %c0_i32_0 : i32, i32
  }
  func.func @transform_3(%arg0: i32) -> (i32, i32) {
    %c0_i32 = arith.constant 0 : i32
    %c0_i32_0 = arith.constant 0 : i32
    %c0_i32_1 = arith.constant 0 : i32
    return %c0_i32, %c0_i32_0 : i32, i32
  }
  func.func @transform_4(%arg0: i32) -> (i32, i32) {
    %c0_i32 = arith.constant 0 : i32
    %c0_i32_0 = arith.constant 0 : i32
    %c0_i32_1 = arith.constant 0 : i32
    return %c0_i32, %c0_i32_0 : i32, i32
  }
  func.func @transform_5(%arg0: i32) -> (i32, i32) {
    %c0_i32 = arith.constant 0 : i32
    %c0_i32_0 = arith.constant 0 : i32
    return %arg0, %c0_i32 : i32, i32
  }
}

</mosaic_0001>

<llo_original>
// kernel: tpu_custom_call.1
$region0: #{tpu_custom_call.1}
  #allocation0 [shape = 'u32[]', space=smem, size = 0x4, offset = 0x4, fixed_abs, tag = 'smem constant byte address 0x4 - core index']
  #allocation1 [shape = 'u32[144,128]{1,0:T(1,128)}', space=vmem, size = 0x12000, scoped, tag = 'internal scratch']
  %s0 = inlined_call_operand.vmem [shape: f32[8,4], index: 0, kind: input, shape index: {}]
  %s1 = inlined_call_operand.vmem [shape: s32[8,3], index: 1, kind: input, shape index: {}]
  %s2 = inlined_call_operand.hbm [shape: f32[4,256], index: 2, kind: input, shape index: {}]
  %s3 = inlined_call_operand.vmem [shape: f32[15,256], index: 3, kind: input, shape index: {}]
  %s4 = inlined_call_operand.vmem [shape: f32[1,256], index: 4, kind: input, shape index: {}]
  %s5 = inlined_call_operand.hbm [shape: f32[8,256], index: 5, kind: output, shape index: {}]
  %s6 = sld [smem:[#allocation0]]
  $region34: #{tpu_custom_call.1} parent=0
    _
  %s8 = ssub.s32 1, %s6
  %s9 = scalar_select 0, %s8, %s6
  $region1: #{tpu_custom_call.1} parent=0
    #allocation2 [shape = 'u8[4096]{0}', space=vmem, size = 0x1000, scoped, tag = 'input window, operand 2, single buffered']
    #allocation3 [shape = 's32[1]{0}', space=sflag, size = 0x4, scoped, tag = 'scoped memory for tpu_custom_call.1']
    #allocation4 [shape = 's32[1]{0}', space=sflag, size = 0x4, scoped, tag = 'scoped memory for tpu_custom_call.1']
    #allocation5 [shape = 'u8[8192]{0}', space=vmem, size = 0x2000, scoped, tag = 'output window, operand 0, single buffered']
    %10 = vsyncpa [#allocation3], 0
    %11 = vsyncpa [#allocation4], 0
    // Predicated region
    $region2: #{tpu_custom_call.1} parent=1 // pred_check
      _
    $region3: #{tpu_custom_call.1} parent=1 // pred_check_branch
      %13 = sbr.rel (0) target = $region5
    $region4: #{tpu_custom_call.1} parent=1 // pred_region
      _
    $region5: #{tpu_custom_call.1} parent=1 // pred_fallthru
      _
    // Predicated region
    $region6: #{tpu_custom_call.1} parent=1 // pred_check
      _
    $region7: #{tpu_custom_call.1} parent=1 // pred_check_branch
      %15 = sbr.rel (0) target = $region9
    $region8: #{tpu_custom_call.1} parent=1 // pred_region
      _
    $region9: #{tpu_custom_call.1} parent=1 // pred_fallthru
      _
    // Predicated region
    $region10: #{tpu_custom_call.1} parent=1 // pred_check
      _
    $region11: #{tpu_custom_call.1} parent=1 // pred_check_branch
      %17 = sbr.rel (0) target = $region13
    $region12: #{tpu_custom_call.1} parent=1 // pred_region
      %s19 = ssub.s32 128, 128
      %20 = vsyncadd [#allocation3], %s19
      %s22 = sshll.u32 [#allocation2], 4
      %s23 = int_to_ptr.vmem [resolvable:$true] %s22
      %25 = dma.hbm_to_vmem [thread:$0]  %s2, 128, %s23, [#allocation3]
    $region13: #{tpu_custom_call.1} parent=1 // pred_fallthru
      _
    // Predicated region
    $region14: #{tpu_custom_call.1} parent=1 // pred_check
      _
    $region15: #{tpu_custom_call.1} parent=1 // pred_check_branch
      %27 = sbr.rel (0) target = $region17
    $region16: #{tpu_custom_call.1} parent=1 // pred_region
      _
    $region17: #{tpu_custom_call.1} parent=1 // pred_fallthru
      _
    // Predicated region
    $region18: #{tpu_custom_call.1} parent=1 // pred_check
      _
    $region19: #{tpu_custom_call.1} parent=1 // pred_check_branch
      %29 = sbr.rel (0) target = $region21
    $region20: #{tpu_custom_call.1} parent=1 // pred_region
      _
    $region21: #{tpu_custom_call.1} parent=1 // pred_fallthru
      _
    // Predicated region
    $region22: #{tpu_custom_call.1} parent=1 // pred_check
      _
    $region23: #{tpu_custom_call.1} parent=1 // pred_check_branch
      %31 = sbr.rel (0) target = $region25
    $region24: #{tpu_custom_call.1} parent=1 // pred_region
      %32 = dma.done [#allocation3], 128
    $region25: #{tpu_custom_call.1} parent=1 // pred_fallthru
      _
    %v33 = vld [vmem:[%s0] sm:$0xff]
    %v34 = vld [vmem:[#allocation2] sm:$0xff]
    %v35 = vlaneseq
    %v36 = vand.u32 %v35, 127
    %v37 = vld [vmem:[%s1] sm:$0xff]
    %38 = vset.pattern.permute.xlu0 0
    %39 = vperm.xlu0 %38, %v37
    %v40 = vpop.permute.xlu0 %39
    %vm41 = vcmp.eq.s32.totalorder %v36, %v40
    %v42 = vsel %vm41, 1, 0
    %v43 = vcvt.s32.f32 %v42
    %v44 = vadd.f32 %v43, 0.0
    %45 = vset.pattern.permute.xlu0 1
    %46 = vperm.xlu0 %45, %v37
    %v47 = vpop.permute.xlu0 %46
    %vm48 = vcmp.eq.s32.totalorder %v36, %v47
    %v49 = vsel %vm48, 1, 0
    %v50 = vcvt.s32.f32 %v49
    %v51 = vadd.f32 %v44, %v50
    %52 = vset.pattern.permute.xlu0 2
    %53 = vperm.xlu0 %52, %v37
    %v54 = vpop.permute.xlu0 %53
    %vm55 = vcmp.eq.s32.totalorder %v36, %v54
    %v56 = vsel %vm55, 1, 0
    %v57 = vcvt.s32.f32 %v56
    %v58 = vadd.f32 %v51, %v57
    %v59 = vld [vmem:[%s3] sm:$0xff]
    %v60 = vld [vmem:[%s3 + $0x8] sm:$0xff]
    %v61 = vld [vmem:[%s3 + $0x10] sm:$0x7f]
    %v62 = vld [vmem:[%s3 + $0x18] sm:$0x7f]
    %vm63 = vcmask 121856
    %v65 = vsel %vm63, %v58, 0
    %vm67 = vcmask 1046528
    %v69 = vsel %vm67, %v61, 0
    %v72 = vsel %vm67, %v62, 0
    %74 = vmatprep.subr.mxu0 %v60
    %75 = vmatpush1.msra.mxu0 %v59
    %76 = vmatprep.subr.mxu0 %v72
    %77 = vmatpush1.msra.mxu0 %v69
    %78 = vmatprep.subr.mxu0 0.0
    %79 = vmatpush1.msra.mxu0 0.0
    %80 = vmatprep.subr.mxu0 0.0
    %81 = vmatpush1.msra.mxu0 0.0
    %82 = vmatprep.subr.mxu0 0.0
    %83 = vmatpush1.msra.mxu0 0.0
    %84 = vmatprep.subr.mxu0 0.0
    %85 = vmatpush1.msra.mxu0 0.0
    %86 = vmatprep.subr.mxu0 0.0
    %87 = vmatpush1.msra.mxu0 0.0
    %88 = vmatprep.subr.mxu0 0.0
    %89 = vmatpush1.msra.mxu0 0.0
    %90 = vmatprep.subr.mxu0 0.0
    %91 = vmatpush1.msra.mxu0 0.0
    %92 = vmatprep.subr.mxu0 0.0
    %93 = vmatpush1.msra.mxu0 0.0
    %94 = vmatprep.subr.mxu0 0.0
    %95 = vmatpush1.msra.mxu0 0.0
    %96 = vmatprep.subr.mxu0 0.0
    %97 = vmatpush1.msra.mxu0 0.0
    %98 = vmatprep.subr.mxu0 0.0
    %99 = vmatpush1.msra.mxu0 0.0
    %100 = vmatprep.subr.mxu0 0.0
    %101 = vmatpush1.msra.mxu0 0.0
    %102 = vmatprep.subr.mxu0 0.0
    %103 = vmatpush1.msra.mxu0 0.0
    %104 = vmatprep.subr.mxu0 0.0
    %105 = vmatpush1.msra.mxu0 0.0
    %106 = vmatprep.subr.mxu0 0.0
    %107 = vmatpush1.msra.mxu0 0.0
    %108 = vmatprep.subr.mxu0 0.0
    %109 = vmatpush1.msra.mxu0 0.0
    %110 = vmatprep.subr.mxu0 0.0
    %111 = vmatpush1.msra.mxu0 0.0
    %112 = vmatprep.subr.mxu0 0.0
    %113 = vmatpush1.msra.mxu0 0.0
    %114 = vmatprep.subr.mxu0 0.0
    %115 = vmatpush1.msra.mxu0 0.0
    %116 = vmatprep.subr.mxu0 0.0
    %117 = vmatpush1.msra.mxu0 0.0
    %118 = vmatprep.subr.mxu0 0.0
    %119 = vmatpush1.msra.mxu0 0.0
    %120 = vmatprep.subr.mxu0 0.0
    %121 = vmatpush1.msra.mxu0 0.0
    %122 = vmatprep.subr.mxu0 0.0
    %123 = vmatpush1.msra.mxu0 0.0
    %124 = vmatprep.subr.mxu0 0.0
    %125 = vmatpush1.msra.mxu0 0.0
    %126 = vmatprep.subr.mxu0 0.0
    %127 = vmatpush1.msra.mxu0 0.0
    %128 = vmatprep.subr.mxu0 0.0
    %129 = vmatpush1.msra.mxu0 0.0
    %130 = vmatprep.subr.mxu0 0.0
    %131 = vmatpush1.msra.mxu0 0.0
    %132 = vmatprep.subr.mxu0 0.0
    %133 = vmatpush1.msra.mxu0 0.0
    %134 = vmatprep.subr.mxu0 0.0
    %135 = vmatpush1.msra.mxu0 0.0
    %136 = vmatprep.subr.mxu0 0.0
    %137 = vmatpush1.msra.mxu0 0.0
    %138 = vmatprep.mubr.f32.mxu0 0.0
    %139 = vmatmul.mubr.f32.gmra.mrb[0].mxu0 %v65
    %v140 = vpop.f32.mrb[0].mxu0
    %v141 = vadd.f32 0.0, %v140
    %v142 = vpop.f32.mrb[0].mxu0
    %v143 = vadd.f32 0.0, %v142
    %144 = vdwg.mxu0
    %v146 = vcombine.high %v34, %v34
    %vm147 = vcmask 31744
    %v149 = vsel %vm147, %v33, 0
    %vm151 = vcmask 1043456
    %v152 = vsel %vm151, %v34, 0
    %v154 = vsel %vm151, %v146, 0
    %156 = vmatprep.subr.mxu0 %v154
    %157 = vmatpush1.msra.mxu0 %v152
    %158 = vmatprep.subr.mxu0 0.0
    %159 = vmatpush1.msra.mxu0 0.0
    %160 = vmatprep.subr.mxu0 0.0
    %161 = vmatpush1.msra.mxu0 0.0
    %162 = vmatprep.subr.mxu0 0.0
    %163 = vmatpush1.msra.mxu0 0.0
    %164 = vmatprep.subr.mxu0 0.0
    %165 = vmatpush1.msra.mxu0 0.0
    %166 = vmatprep.subr.mxu0 0.0
    %167 = vmatpush1.msra.mxu0 0.0
    %168 = vmatprep.subr.mxu0 0.0
    %169 = vmatpush1.msra.mxu0 0.0
    %170 = vmatprep.subr.mxu0 0.0
    %171 = vmatpush1.msra.mxu0 0.0
    %172 = vmatprep.subr.mxu0 0.0
    %173 = vmatpush1.msra.mxu0 0.0
    %174 = vmatprep.subr.mxu0 0.0
    %175 = vmatpush1.msra.mxu0 0.0
    %176 = vmatprep.subr.mxu0 0.0
    %177 = vmatpush1.msra.mxu0 0.0
    %178 = vmatprep.subr.mxu0 0.0
    %179 = vmatpush1.msra.mxu0 0.0
    %180 = vmatprep.subr.mxu0 0.0
    %181 = vmatpush1.msra.mxu0 0.0
    %182 = vmatprep.subr.mxu0 0.0
    %183 = vmatpush1.msra.mxu0 0.0
    %184 = vmatprep.subr.mxu0 0.0
    %185 = vmatpush1.msra.mxu0 0.0
    %186 = vmatprep.subr.mxu0 0.0
    %187 = vmatpush1.msra.mxu0 0.0
    %188 = vmatprep.subr.mxu0 0.0
    %189 = vmatpush1.msra.mxu0 0.0
    %190 = vmatprep.subr.mxu0 0.0
    %191 = vmatpush1.msra.mxu0 0.0
    %192 = vmatprep.subr.mxu0 0.0
    %193 = vmatpush1.msra.mxu0 0.0
    %194 = vmatprep.subr.mxu0 0.0
    %195 = vmatpush1.msra.mxu0 0.0
    %196 = vmatprep.subr.mxu0 0.0
    %197 = vmatpush1.msra.mxu0 0.0
    %198 = vmatprep.subr.mxu0 0.0
    %199 = vmatpush1.msra.mxu0 0.0
    %200 = vmatprep.subr.mxu0 0.0
    %201 = vmatpush1.msra.mxu0 0.0
    %202 = vmatprep.subr.mxu0 0.0
    %203 = vmatpush1.msra.mxu0 0.0
    %204 = vmatprep.subr.mxu0 0.0
    %205 = vmatpush1.msra.mxu0 0.0
    %206 = vmatprep.subr.mxu0 0.0
    %207 = vmatpush1.msra.mxu0 0.0
    %208 = vmatprep.subr.mxu0 0.0
    %209 = vmatpush1.msra.mxu0 0.0
    %210 = vmatprep.subr.mxu0 0.0
    %211 = vmatpush1.msra.mxu0 0.0
    %212 = vmatprep.subr.mxu0 0.0
    %213 = vmatpush1.msra.mxu0 0.0
    %214 = vmatprep.subr.mxu0 0.0
    %215 = vmatpush1.msra.mxu0 0.0
    %216 = vmatprep.subr.mxu0 0.0
    %217 = vmatpush1.msra.mxu0 0.0
    %218 = vmatprep.subr.mxu0 0.0
    %219 = vmatpush1.msra.mxu0 0.0
    %220 = vmatprep.mubr.f32.mxu0 0.0
    %221 = vmatmul.mubr.f32.gmra.mrb[0].mxu0 %v149
    %v222 = vpop.f32.mrb[0].mxu0
    %v223 = vadd.f32 %v141, %v222
    %v224 = vpop.f32.mrb[0].mxu0
    %v225 = vadd.f32 %v143, %v224
    %226 = vdwg.mxu0
    %v227 = vld [vmem:[%s4] sm:$0x3]
    %v229 = vlaneseq
    %v230 = vshrl.u32 %v229, 7
    %v231 = vsub.s32 0, %v230
    %v232 = vrot.slane %v227, %v231
    %v233 = vlaneseq
    %v234 = vshrl.u32 %v233, 7
    %v235 = vsub.s32 1, %v234
    %v236 = vrot.slane %v227, %v235
    %v239 = vadd.f32 %v223, %v232
    %v240 = vadd.f32 %v225, %v236
    %241 = vst [vmem:[#allocation5] sm:$0xff] %v239
    %242 = vst [vmem:[#allocation5 + $0x8] sm:$0xff] %v240
    // Predicated region
    $region26: #{tpu_custom_call.1} parent=1 // pred_check
      _
    $region27: #{tpu_custom_call.1} parent=1 // pred_check_branch
      %244 = sbr.rel (0) target = $region29
    $region28: #{tpu_custom_call.1} parent=1 // pred_region
      %s246 = ssub.s32 256, 256
      %247 = vsyncadd [#allocation4], %s246
      %s249 = sshll.u32 [#allocation5], 4
      %s250 = int_to_ptr.vmem [resolvable:$true] %s249
      %252 = dma.vmem_to_hbm [thread:$0]  %s250, 256, %s5, [#allocation4]
    $region29: #{tpu_custom_call.1} parent=1 // pred_fallthru
      _
    // Predicated region
    $region30: #{tpu_custom_call.1} parent=1 // pred_check
      _
    $region31: #{tpu_custom_call.1} parent=1 // pred_check_branch
      %254 = sbr.rel (0) target = $region33
    $region32: #{tpu_custom_call.1} parent=1 // pred_region
      %255 = dma.done [#allocation4], 256
    $region33: #{tpu_custom_call.1} parent=1 // pred_fallthru
      _
    %256 = vsyncpa [#allocation3], 1
    %257 = vsyncpa [#allocation4], 1

</llo_original>
